<compile_context>
chip_gen: v7x
topology: tpu7x:2x2x1
jax: 0.10.0
libtpu: 0.0.40
codegen_flags: <defaults>
</compile_context>

<pallas_src>
import numpy as np
import jax
import jax.numpy as jnp
from jax.experimental import pallas as pl
from jax.experimental.pallas import tpu as pltpu


def _round_up(x, m):
    return (x + m - 1) // m * m


# ----------------------------------------------------------------------------
# Tile selection: tk = min(requested, padded-N), N padded to tk granularity,
# tm = largest 128-multiple dividing tk that is <= requested and (if possible)
# leaves >= 2 row tiles so both v7x TensorCores get work.
# ----------------------------------------------------------------------------
def _choose_tiles(n, tm_req, tk_req):
    n128 = _round_up(max(n, 128), 128)
    tk = min(_round_up(max(tk_req, 128), 128), n128)
    n_pad = _round_up(max(n, 128), tk)
    tm_cap = min(_round_up(max(tm_req, 128), 128), tk)
    cands = [d * 128 for d in range(1, tk // 128 + 1)
             if tk % (d * 128) == 0 and d * 128 <= tm_cap]
    two_tile = [t for t in cands if n_pad // t >= 2]
    tm = max(two_tile) if two_tile else max(cands)
    return tm, tk, n_pad


# ----------------------------------------------------------------------------
# Per-row-tile reduction ranges from the per-session block-diagonal structure.
# Row tile i only needs k tiles covering the column span of the sessions that
# intersect its rows.
# ----------------------------------------------------------------------------
def _session_k_ranges(node_num, n_nodes, n_pad, tm, tk):
    n_row_tiles = n_pad // tm
    n_k_tiles = n_pad // tk
    k_lo = np.zeros(n_row_tiles, np.int32)
    k_len = np.zeros(n_row_tiles, np.int32)
    if node_num is None:
        k_len[:] = n_k_tiles
        return k_lo, k_len
    node_num = np.asarray(node_num, dtype=np.int64)
    offsets = np.concatenate([[0], np.cumsum(node_num)])
    assert int(offsets[-1]) == n_nodes, "node_num must sum to num_nodes"
    for i in range(n_row_tiles):
        r0 = i * tm
        r1 = min((i + 1) * tm, n_nodes)
        if r0 >= n_nodes:
            continue  # fully padded row tile -> nothing to accumulate
        b0 = int(np.searchsorted(offsets, r0, side="right")) - 1
        b1 = int(np.searchsorted(offsets, r1 - 1, side="right")) - 1
        c0 = int(offsets[b0])
        c1 = int(offsets[b1 + 1])
        lo = c0 // tk
        hi = -(-c1 // tk)
        k_lo[i] = lo
        k_len[i] = hi - lo
    return k_lo, k_len


# ----------------------------------------------------------------------------
# Padded, pre-scaled, bf16 normalized adjacency (PyG LightGCNConv semantics:
# out[col] += deg^-1/2[row] * deg^-1/2[col] * x[row], self-loops added).
# One f32 scatter (accurate duplicate-edge accumulation) + one cast.
# ----------------------------------------------------------------------------
def build_norm_adj_padded(edge_index, num_nodes, n_pad, *, scale=0.5,
                          dtype=jnp.bfloat16):
    row = edge_index[0]
    col = edge_index[1]
    loop = jnp.arange(num_nodes, dtype=row.dtype)
    row = jnp.concatenate([row, loop])
    col = jnp.concatenate([col, loop])
    deg = jnp.zeros((num_nodes,), jnp.float32).at[col].add(1.0)
    deg_inv_sqrt = jnp.where(deg > 0, deg ** -0.5, 0.0)
    norm = scale * deg_inv_sqrt[row] * deg_inv_sqrt[col]
    a = jnp.zeros((n_pad, n_pad), jnp.float32).at[col, row].add(norm)
    return a.astype(dtype)


# ----------------------------------------------------------------------------
# Pallas kernel: fused tiled LightGCN layer (1 conv) + layer mean.
#   out[i-tile] = 0.5 * x[i-tile] + sum_{k in session range(i)} A05[i, k] @ x[k]
# A05 already carries the 0.5 factor.  X is a single VMEM-resident block.
# ----------------------------------------------------------------------------
def _make_lightgcn_kernel(tm, tk):
    def kernel(k_lo_ref, k_len_ref, a_ref, x_ref, o_ref, acc_ref):
        i = pl.program_id(0)
        k = pl.program_id(1)

        @pl.when(k == 0)
        def _init():
            r0 = pl.multiple_of(i * tm, tm)
            # self-term of the layer mean, from the resident X block
            acc_ref[...] = 0.5 * x_ref[pl.ds(r0, tm), :].astype(jnp.float32)

        @pl.when(k < k_len_ref[i])           # skip zero off-diagonal tiles
        def _accumulate():
            kb = k_lo_ref[i] + k
            c0 = pl.multiple_of(kb * tk, tk)
            acc_ref[...] += jnp.dot(a_ref[...], x_ref[pl.ds(c0, tk), :],
                                    preferred_element_type=jnp.float32)

        @pl.when(k == pl.num_programs(1) - 1)
        def _store():
            o_ref[...] = acc_ref[...].astype(o_ref.dtype)

    return kernel


def lightgcn_pallas(x, edge_index, node_num=None, *, tm=512, tk=2048):
    """x: (N, H) f32 node features, edge_index: (2, E) int32 (per-session,
    block-diagonal when node_num is given).  Returns 0.5 * (x + A_norm @ x)."""
    N, H = x.shape
    Hp = _round_up(max(H, 128), 128)           # lane-dense output
    tm, tk, Np = _choose_tiles(N, tm, tk)
    n_row_tiles = Np // tm

    a_bf = build_norm_adj_padded(edge_index, N, Np, scale=0.5,
                                 dtype=jnp.bfloat16)
    x_bf = jnp.pad(x, ((0, Np - N), (0, Hp - H))).astype(jnp.bfloat16)

    k_lo, k_len = _session_k_ranges(node_num, N, Np, tm, tk)
    k_max = max(int(k_len.max()), 1)

    # VMEM budget: 2x A tile (bf16) + 2x resident X + 2x out tile + acc + slack.
    vmem_need = (2 * tm * tk * 2 + 2 * Np * Hp * 2
                 + 2 * tm * Hp * 4 + tm * Hp * 4 + (1 << 20))
    vmem_limit = int(min(max(vmem_need, 32 << 20), 64 << 20))

    def a_map(i, k, k_lo_ref, k_len_ref):
        # Clamp so skipped steps repeat the previous block index (no new DMA).
        kb = k_lo_ref[i] + jnp.maximum(jnp.minimum(k, k_len_ref[i] - 1), 0)
        return (i, kb)

    out = pl.pallas_call(
        _make_lightgcn_kernel(tm, tk),
        out_shape=jax.ShapeDtypeStruct((Np, Hp), x.dtype),
        grid_spec=pltpu.PrefetchScalarGridSpec(
            num_scalar_prefetch=2,
            grid=(n_row_tiles, k_max),
            in_specs=[
                pl.BlockSpec((tm, tk), a_map),                         # A tile
                pl.BlockSpec((Np, Hp), lambda i, k, lo, ln: (0, 0)),   # resident X
            ],
            out_specs=pl.BlockSpec((tm, Hp), lambda i, k, lo, ln: (i, 0)),
            scratch_shapes=[pltpu.VMEM((tm, Hp), jnp.float32)],
        ),
        compiler_params=pltpu.CompilerParams(
            dimension_semantics=("parallel", "arbitrary"),
            vmem_limit_bytes=vmem_limit,
        ),
    )(jnp.asarray(k_lo, jnp.int32), jnp.asarray(k_len, jnp.int32), a_bf, x_bf)

    return out[:N, :H]


# ----------------------------------------------------------------------------
# Pure-JAX reference (PyG LightGCNConv + layer mean) for correctness checks.
# ----------------------------------------------------------------------------
def lightgcn_ref(x, edge_index):
    N = x.shape[0]
    loop = jnp.arange(N, dtype=edge_index.dtype)
    row = jnp.concatenate([edge_index[0], loop])
    col = jnp.concatenate([edge_index[1], loop])
    deg = jnp.zeros((N,), jnp.float32).at[col].add(1.0)
    dis = jnp.where(deg > 0, deg ** -0.5, 0.0)
    norm = dis[row] * dis[col]
    conv = jnp.zeros_like(x).at[col].add(norm[:, None] * x[row])
    return 0.5 * (x + conv)


# ----------------------------------------------------------------------------
# GroupGraph wrapper (only the LightGCN path is exercised by the forward as
# written: alternative=2, use_self_loops=True, eval-mode dropout).
# ----------------------------------------------------------------------------
class GroupGraphPallas:
    def __init__(self, n_node, hidden_size, dropout=0.5, item_fusing=True,
                 seed=0):
        self.hidden_size = hidden_size
        self.global_dropout = dropout
        self.item_fusing = item_fusing
        k0 = jax.random.PRNGKey(seed)
        # nn.Embedding(n_node, hidden_size) (not used in the hot path)
        self.embedding_edge = jax.random.normal(
            k0, (n_node, hidden_size), jnp.float32) * 0.02
        # TODO(synk): GRUCell / LinkPred weights omitted (unused in this forward).

    def rebuilt_sess(self, session_embedding, node_num, sess_item_index,
                     seq_lens):
        node_offsets = np.concatenate([[0], np.cumsum(node_num)[:-1]])
        seq_offsets = np.concatenate([[0], np.cumsum(seq_lens)[:-1]])
        out = []
        for b in range(len(node_num)):
            idx = sess_item_index[seq_offsets[b]:seq_offsets[b] + seq_lens[b]]
            out.append(session_embedding[node_offsets[b] + idx])
        return tuple(out)

    def forward(self, hidden, edge_index, node_num, sess_item_index,
                seq_lens):
        l0_penalty_ = 0.0
        # --- alternative == 2: LightGCN neighborhood aggregation (Pallas) ---
        hidden = lightgcn_pallas(hidden, edge_index, node_num)
        # --- dropout: eval mode -> identity ---
        # --- rebuild per-session sequences (item_fusing == True branch) ---
        sess_hidden = self.rebuilt_sess(hidden, node_num, sess_item_index,
                                        seq_lens)
        return hidden, sess_hidden, l0_penalty_


# ----------------------------------------------------------------------------
# Helpers for building deterministic block-diagonal test graphs.
# ----------------------------------------------------------------------------
def _make_block_diag_edges(node_num, rng, edges_per_node=3):
    edges = []
    off = 0
    for n in node_num:
        n = int(n)
        for _ in range(edges_per_node * n):
            s = rng.randint(0, n) + off
            t = rng.randint(0, n) + off
            edges.append((s, t))
        off += n
    return jnp.asarray(np.array(edges, dtype=np.int32).T)   # (2, E)


if __name__ == "__main__":
    key = jax.random.PRNGKey(0)
    kx, kx2 = jax.random.split(key)
    rng = np.random.RandomState(0)

    # ---- model-scale example (2 sessions, hidden=32) ----
    n_node = 256
    hidden_size = 32
    node_num = np.array([70, 90], dtype=np.int32)
    num_nodes = int(node_num.sum())                 # 160 batched graph nodes
    seq_lens = np.array([6, 8], dtype=np.int32)

    hidden = jax.random.normal(kx, (num_nodes, hidden_size), jnp.float32)
    edge_index = _make_block_diag_edges(node_num, rng)
    sess_item_index = np.concatenate([
        rng.randint(0, node_num[b], size=seq_lens[b]).astype(np.int32)
        for b in range(len(node_num))
    ])

    model = GroupGraphPallas(n_node=n_node, hidden_size=hidden_size,
                             item_fusing=True, seed=0)
    out_hidden, sess_hidden, l0 = model.forward(
        hidden, edge_index, node_num, sess_item_index, seq_lens)
    out_hidden = jax.block_until_ready(out_hidden)
    for s in sess_hidden:
        jax.block_until_ready(s)

    ref = np.asarray(lightgcn_ref(hidden, edge_index))
    np.testing.assert_allclose(np.asarray(out_hidden), ref,
                               rtol=3e-2, atol=3e-2)
    assert out_hidden.shape == (num_nodes, hidden_size)
    assert sess_hidden[0].shape == (int(seq_lens[0]), hidden_size)
    assert sess_hidden[1].shape == (int(seq_lens[1]), hidden_size)

    # ---- small-tile path: multi-k reduction with accumulator ----
    out_small = jax.block_until_ready(
        lightgcn_pallas(hidden, edge_index, node_num, tm=128, tk=128))
    np.testing.assert_allclose(np.asarray(out_small), ref,
                               rtol=3e-2, atol=3e-2)

    # ---- larger block-diagonal graph: exercises data-dependent k_lo / k_len
    #      (nonzero offsets, skipped off-diagonal tiles, clamped index map) ----
    node_num2 = np.array([100, 110, 95, 105], dtype=np.int32)
    N2 = int(node_num2.sum())                       # 410 nodes
    hidden2 = jax.random.normal(kx2, (N2, hidden_size), jnp.float32)
    edge_index2 = _make_block_diag_edges(node_num2, rng)
    ref2 = np.asarray(lightgcn_ref(hidden2, edge_index2))

    out2_small = jax.block_until_ready(
        lightgcn_pallas(hidden2, edge_index2, node_num2, tm=128, tk=128))
    np.testing.assert_allclose(np.asarray(out2_small), ref2,
                               rtol=3e-2, atol=3e-2)

    out2_default = jax.block_until_ready(
        lightgcn_pallas(hidden2, edge_index2, node_num2))
    np.testing.assert_allclose(np.asarray(out2_default), ref2,
                               rtol=3e-2, atol=3e-2)

    print("KERNEL_OK")
</pallas_src>

<mosaic_0001>
module attributes {stable_mosaic.version = 11 : i64} {
  func.func @kernel(%arg0: i32, %arg1: i32, %arg2: memref<2xi32, #tpu.memory_space<smem>>, %arg3: memref<2xi32, #tpu.memory_space<smem>>, %arg4: memref<128x256xbf16, #tpu.memory_space<vmem>>, %arg5: memref<256x128xbf16, #tpu.memory_space<vmem>>, %arg6: memref<128x128xf32, #tpu.memory_space<vmem>>, %arg7: memref<128x128xf32, #tpu.memory_space<vmem>>) attributes {dimension_semantics = [#tpu.dimension_semantics<parallel>, #tpu.dimension_semantics<arbitrary>], iteration_bounds = array<i64: 2, 1>, scalar_prefetch = 2 : i64, scratch_operands = 1 : i64, tpu.core_type = #tpu.core_type<tc>, window_params = [{transform_indices = @transform_0, window_bounds = array<i64: 128, 256>}, {pipeline_mode = #tpu.pipeline_mode<synchronous>, transform_indices = @transform_1, window_bounds = array<i64: 256, 128>}, {transform_indices = @transform_2, window_bounds = array<i64: 128, 128>}]} {
    %c0_i32 = arith.constant 0 : i32
    %0 = arith.cmpi eq, %arg1, %c0_i32 : i32
    %1 = arith.extui %0 : i1 to i32
    %c0_i32_0 = arith.constant 0 : i32
    %2 = arith.cmpi ne, %1, %c0_i32_0 : i32
    scf.if %2 {
      %c128_i32 = arith.constant 128 : i32
      %11 = arith.muli %arg0, %c128_i32 : i32
      %12 = tpu.assume_multiple %11, 128 : i32
      %13 = arith.index_cast %12 : i32 to index
      %c0 = arith.constant 0 : index
      %14 = vector.load %arg5[%13, %c0] : memref<256x128xbf16, #tpu.memory_space<vmem>>, vector<128x128xbf16>
      %15 = arith.extf %14 : vector<128x128xbf16> to vector<128x128xf32>
      %cst = arith.constant 5.000000e-01 : f32
      %16 = vector.broadcast %cst : f32 to vector<128x128xf32>
      %17 = arith.mulf %16, %15 : vector<128x128xf32>
      %c0_4 = arith.constant 0 : index
      %c0_5 = arith.constant 0 : index
      %18 = vector.load %arg7[%c0_4, %c0_5] : memref<128x128xf32, #tpu.memory_space<vmem>>, vector<128x128xf32>
      tpu.vector_store %arg7[%c0_4, %c0_5], %17 {strides = array<i32>} : memref<128x128xf32, #tpu.memory_space<vmem>>, vector<128x128xf32>,
    } else {
    }
    %3 = arith.index_cast %arg0 : i32 to index
    %4 = memref.load %arg3[%3] : memref<2xi32, #tpu.memory_space<smem>>
    %5 = arith.cmpi slt, %arg1, %4 : i32
    %6 = arith.extui %5 : i1 to i32
    %c0_i32_1 = arith.constant 0 : i32
    %7 = arith.cmpi ne, %6, %c0_i32_1 : i32
    scf.if %7 {
      %11 = arith.index_cast %arg0 : i32 to index
      %12 = memref.load %arg2[%11] : memref<2xi32, #tpu.memory_space<smem>>
      %13 = arith.addi %12, %arg1 : i32
      %c256_i32 = arith.constant 256 : i32
      %14 = arith.muli %13, %c256_i32 : i32
      %15 = tpu.assume_multiple %14, 256 : i32
      %c0 = arith.constant 0 : index
      %c0_4 = arith.constant 0 : index
      %16 = vector.load %arg7[%c0, %c0_4] : memref<128x128xf32, #tpu.memory_space<vmem>>, vector<128x128xf32>
      %c0_5 = arith.constant 0 : index
      %c0_6 = arith.constant 0 : index
      %17 = vector.load %arg4[%c0_5, %c0_6] : memref<128x256xbf16, #tpu.memory_space<vmem>>, vector<128x256xbf16>
      %18 = arith.index_cast %15 : i32 to index
      %c0_7 = arith.constant 0 : index
      %19 = vector.load %arg5[%18, %c0_7] : memref<256x128xbf16, #tpu.memory_space<vmem>>, vector<256x128xbf16>
      %cst = arith.constant dense<0.000000e+00> : vector<128x128xf32>
      %20 = tpu.matmul %17, %19, %cst {dimension_numbers = #tpu.dot_dimension_numbers<[1], [0], [0], [1], [0, 0, 1, 1], [], []>} : vector<128x256xbf16>, vector<256x128xbf16>, vector<128x128xf32> -> vector<128x128xf32>
      %21 = arith.addf %16, %20 : vector<128x128xf32>
      %c0_8 = arith.constant 0 : index
      %c0_9 = arith.constant 0 : index
      %22 = vector.load %arg7[%c0_8, %c0_9] : memref<128x128xf32, #tpu.memory_space<vmem>>, vector<128x128xf32>
      tpu.vector_store %arg7[%c0_8, %c0_9], %21 {strides = array<i32>} : memref<128x128xf32, #tpu.memory_space<vmem>>, vector<128x128xf32>,
    } else {
    }
    %c0_i32_2 = arith.constant 0 : i32
    %8 = arith.cmpi eq, %arg1, %c0_i32_2 : i32
    %9 = arith.extui %8 : i1 to i32
    %c0_i32_3 = arith.constant 0 : i32
    %10 = arith.cmpi ne, %9, %c0_i32_3 : i32
    scf.if %10 {
      %c0 = arith.constant 0 : index
      %c0_4 = arith.constant 0 : index
      %11 = vector.load %arg7[%c0, %c0_4] : memref<128x128xf32, #tpu.memory_space<vmem>>, vector<128x128xf32>
      %c0_5 = arith.constant 0 : index
      %c0_6 = arith.constant 0 : index
      %12 = vector.load %arg6[%c0_5, %c0_6] : memref<128x128xf32, #tpu.memory_space<vmem>>, vector<128x128xf32>
      tpu.vector_store %arg6[%c0_5, %c0_6], %11 {strides = array<i32>} : memref<128x128xf32, #tpu.memory_space<vmem>>, vector<128x128xf32>,
    } else {
    }
    return
  }
  func.func @transform_0(%arg0: i32, %arg1: i32, %arg2: memref<2xi32, #tpu.memory_space<smem>>, %arg3: memref<2xi32, #tpu.memory_space<smem>>) -> (i32, i32) {
    %0 = arith.index_cast %arg0 : i32 to index
    %1 = memref.load %arg2[%0] : memref<2xi32, #tpu.memory_space<smem>>
    %2 = arith.index_cast %arg0 : i32 to index
    %3 = memref.load %arg3[%2] : memref<2xi32, #tpu.memory_space<smem>>
    %c1_i32 = arith.constant 1 : i32
    %4 = arith.subi %3, %c1_i32 : i32
    %5 = arith.minsi %arg1, %4 : i32
    %c0_i32 = arith.constant 0 : i32
    %6 = arith.maxsi %5, %c0_i32 : i32
    %7 = arith.addi %1, %6 : i32
    %c0_i32_0 = arith.constant 0 : i32
    return %arg0, %7 : i32, i32
  }
  func.func @transform_1(%arg0: i32, %arg1: i32, %arg2: memref<2xi32, #tpu.memory_space<smem>>, %arg3: memref<2xi32, #tpu.memory_space<smem>>) -> (i32, i32) {
    %c0_i32 = arith.constant 0 : i32
    %c0_i32_0 = arith.constant 0 : i32
    %c0_i32_1 = arith.constant 0 : i32
    return %c0_i32, %c0_i32_0 : i32, i32
  }
  func.func @transform_2(%arg0: i32, %arg1: i32, %arg2: memref<2xi32, #tpu.memory_space<smem>>, %arg3: memref<2xi32, #tpu.memory_space<smem>>) -> (i32, i32) {
    %c0_i32 = arith.constant 0 : i32
    %c0_i32_0 = arith.constant 0 : i32
    return %arg0, %c0_i32 : i32, i32
  }
}

</mosaic_0001>

<llo_original>
// kernel: tpu_custom_call.1
$region0: #{tpu_custom_call.1}
  #allocation0 [shape = 'u32[]', space=smem, size = 0x4, offset = 0x4, fixed_abs, tag = 'smem constant byte address 0x4 - core index']
  #allocation1 [shape = 'u32[144,128]{1,0:T(1,128)}', space=vmem, size = 0x12000, scoped, tag = 'internal scratch']
  #allocation2 [shape = 'f32[128,128]{1,0:T(8,128)}', space=vmem, size = 0x10000, scoped, tag = 'scratch operand']
  #allocation3 [shape = 's32[1]{0}', space=sflag, size = 0x4, scoped, tag = 'scoped memory for tpu_custom_call.1']
  #allocation4 [shape = 'u8[512]{0}', space=smem, size = 0x200, scoped, tag = 'prefetched SMEM operand 0']
  #allocation5 [shape = 'u8[512]{0}', space=smem, size = 0x200, scoped, tag = 'prefetched SMEM operand 1']
  %s0 = inlined_call_operand.hbm [shape: s32[2], index: 0, kind: input, shape index: {}]
  %s1 = inlined_call_operand.vmem [shape: s32[2], index: 1, kind: input, shape index: {}]
  %s2 = inlined_call_operand.hbm [shape: bf16[256,256], index: 2, kind: input, shape index: {}]
  %s3 = inlined_call_operand.hbm [shape: bf16[256,128], index: 3, kind: input, shape index: {}]
  %s4 = inlined_call_operand.hbm [shape: f32[256,128], index: 4, kind: output, shape index: {}]
  %s5 = sld [smem:[#allocation0]]
  $region61: #{tpu_custom_call.1} parent=0
    _
  %s7 = ssub.s32 1, %s5
  %s8 = scalar_select 0, %s7, %s5
  %10 = dma.hbm_to_smem %s0, 16, [#allocation4], [#allocation3]
  %s11 = sshll.u32 %s1, 4
  %s12 = int_to_ptr.vmem [resolvable:$true] %s11
  %14 = dma.vmem_to_smem %s12, 16, [#allocation5], [#allocation3]
  %15 = dma.done [#allocation3], 32
  %16 = sfence
  $region1: #{tpu_custom_call.1} parent=0
    #allocation6 [shape = 'u8[131072]{0}', space=vmem, size = 0x20000, scoped, tag = 'input window, operand 2']
    #allocation7 [shape = 's32[2]{0}', space=sflag, size = 0x8, scoped, tag = 'scoped memory for tpu_custom_call.1']
    #allocation8 [shape = 's32[2]{0}', space=sflag, size = 0x8, scoped, tag = 'scoped memory for tpu_custom_call.1']
    #allocation9 [shape = 'u8[65536]{0}', space=vmem, size = 0x10000, scoped, tag = 'input window, operand 3, single buffered']
    #allocation10 [shape = 's32[1]{0}', space=sflag, size = 0x4, scoped, tag = 'scoped memory for tpu_custom_call.1']
    #allocation11 [shape = 'u8[131072]{0}', space=vmem, size = 0x20000, scoped, tag = 'output window, operand 0']
    %17 = vsyncpa [#allocation7], 0
    %s18 = scalar_lea.sflag [#allocation7], 1
    %19 = vsyncpa %s18, 0
    %20 = vsyncpa [#allocation10], 0
    %21 = vsyncpa [#allocation8], 0
    %s22 = scalar_lea.sflag [#allocation8], 1
    %23 = vsyncpa %s22, 0
    loop: start=0, step=1, limit=4
    $region2: #{tpu_custom_call.1} parent=1 // loop_pre_header
      _
    $region3: #{tpu_custom_call.1} parent=1 // loop_header
      %s25 = sphi 0, %s29
      %p26 = scmp.ge.s32.totalorder %s25, 4
      %s32 = sphi 0, %s44
      %s33 = sphi 0, %s40
      %s34 = sphi 0, %s32
      %s35 = sphi 0, %s33
      %s36 = sphi 0, %s34
      %s37 = sphi 0, %s35
      %s65 = sphi 0, %s67
      %s68 = sphi 0, %s65
      %s69 = sphi 0, %s68
      %s85 = sphi 0, %s69
      %s89 = sphi 0, %s89
      %s91 = sphi 0, %s89
      %s92 = sphi 0, %s91
      %s106 = sphi 0, %s92
      %s112 = sphi 0, %s114
      %s115 = sphi 0, %s112
      %s116 = sphi 0, %s115
      %s132 = sphi 0, %s116
    $region4: #{tpu_custom_call.1} parent=1 // loop_header_branch
      %28 = sbr.rel (%p26) target = $region8
    $region5: #{tpu_custom_call.1} parent=1 // loop_body
      %s30 = ssub.s32 %s25, 1
      %s31 = ssub.s32 %s25, 2
      %s38 = sadd.s32 1, %s33
      %p39 = scmp.ge.s32.totalorder %s38, 1
      %s40 = scalar_select %p39, 0, %s38
      %s41 = sadd.s32 1, %s32
      %s42 = scalar_select %p39, %s41, %s32
      %p43 = scmp.ge.s32.totalorder %s42, 2
      %s44 = scalar_select %p43, 0, %s42
      %s45 = sld [smem:[#allocation4 + %s32]]
      %s46 = sld [smem:[#allocation5 + %s32]]
      %s47 = ssub.s32 %s46, 1
      %p48 = scmp.lt.s32.totalorder %s33, %s47
      %s49 = scalar_select %p48, %s33, %s47
      %p50 = scmp.gt.s32.totalorder %s49, 0
      %s51 = scalar_select %p50, %s49, 0
      %s52 = sadd.s32 %s45, %s51
      %s53 = sld [smem:[#allocation4 + %s44]]
      %s54 = sld [smem:[#allocation5 + %s44]]
      %s55 = ssub.s32 %s54, 1
      %p56 = scmp.lt.s32.totalorder %s40, %s55
      %s57 = scalar_select %p56, %s40, %s55
      %p58 = scmp.gt.s32.totalorder %s57, 0
      %s59 = scalar_select %p58, %s57, 0
      %s60 = sadd.s32 %s53, %s59
      %s61 = ssub.s32 %s32, %s44
      %s62 = ssub.s32 %s52, %s60
      %s63 = sor.u32 %s61, %s62
      %p64 = scmp.eq.s32.totalorder %s63, 0
      %s66 = sadd.s32 %s65, 1
      %s67 = scalar_select %p64, %s65, %s66
      %p70 = pneg %p64
      %p71 = scmp.eq.s32.totalorder %s25, 1
      %p72 = por %p70, %p71
      %p73 = scmp.ne.s32.totalorder %s65, %s68
      %p74 = scmp.eq.s32.totalorder %s25, 0
      %p75 = por %p73, %p74
      %p76 = scmp.ne.s32.totalorder %s65, %s68
      %p77 = scmp.eq.s32.totalorder %s30, 1
      %p78 = por %p76, %p77
      %p79 = scmp.ne.s32.totalorder %s68, %s69
      %p80 = scmp.eq.s32.totalorder %s30, 0
      %p81 = por %p79, %p80
      %p82 = scmp.ne.s32.totalorder %s68, %s69
      %p83 = scmp.eq.s32.totalorder %s31, 1
      %p84 = por %p82, %p83
      %p86 = scmp.ne.s32.totalorder %s69, %s85
      %p87 = scmp.eq.s32.totalorder %s31, 0
      %p88 = por %p86, %p87
      %s90 = sadd.s32 %s89, 1
      %p93 = scmp.eq.s32.totalorder %s25, 1
      %p94 = scmp.ne.s32.totalorder %s89, %s91
      %p95 = scmp.eq.s32.totalorder %s25, 0
      %p96 = por %p94, %p95
      %p97 = scmp.ne.s32.totalorder %s89, %s91
      %p98 = scmp.eq.s32.totalorder %s30, 1
      %p99 = por %p97, %p98
      %p100 = scmp.ne.s32.totalorder %s91, %s92
      %p101 = scmp.eq.s32.totalorder %s30, 0
      %p102 = por %p100, %p101
      %p103 = scmp.ne.s32.totalorder %s91, %s92
      %p104 = scmp.eq.s32.totalorder %s31, 1
      %p105 = por %p103, %p104
      %p107 = scmp.ne.s32.totalorder %s92, %s106
      %p108 = scmp.eq.s32.totalorder %s31, 0
      %p109 = por %p107, %p108
      %s110 = ssub.s32 %s32, %s44
      %p111 = scmp.eq.s32.totalorder %s110, 0
      %s113 = sadd.s32 %s112, 1
      %s114 = scalar_select %p111, %s112, %s113
      %p117 = pneg %p111
      %p118 = scmp.eq.s32.totalorder %s25, 1
      %p119 = por %p117, %p118
      %p120 = scmp.ne.s32.totalorder %s112, %s115
      %p121 = scmp.eq.s32.totalorder %s25, 0
      %p122 = por %p120, %p121
      %p123 = scmp.ne.s32.totalorder %s112, %s115
      %p124 = scmp.eq.s32.totalorder %s30, 1
      %p125 = por %p123, %p124
      %p126 = scmp.ne.s32.totalorder %s115, %s116
      %p127 = scmp.eq.s32.totalorder %s30, 0
      %p128 = por %p126, %p127
      %p129 = scmp.ne.s32.totalorder %s115, %s116
      %p130 = scmp.eq.s32.totalorder %s31, 1
      %p131 = por %p129, %p130
      %p133 = scmp.ne.s32.totalorder %s116, %s132
      %p134 = scmp.eq.s32.totalorder %s31, 0
      %p135 = por %p133, %p134
      %p136 = scmp.le.s32.totalorder 1, %s25
      %p137 = scmp.lt.s32.totalorder %s25, 3
      %p138 = pnand %p136, %p137
      %p139 = pneg %p138
      // Predicated region
      $region9: #{tpu_custom_call.1} parent=5 // pred_check
        _
      $region10: #{tpu_custom_call.1} parent=5 // pred_check_branch
        %141 = sbr.rel (%p138) target = $region12
      $region11: #{tpu_custom_call.1} parent=5 // pred_region
        %s142 = ssub.s32 %s25, 1
        // Predicated region
        $region13: #{tpu_custom_call.1} parent=11 // pred_check
          %p143 = pneg %p102
        $region14: #{tpu_custom_call.1} parent=11 // pred_check_branch
          %145 = sbr.rel (%p143) target = $region16
        $region15: #{tpu_custom_call.1} parent=11 // pred_region
          %s147 = ssub.s32 2048, 2048
          %148 = vsyncadd [#allocation10], %s147
          %s149 = sshll.u32 [#allocation9], 4
          %s150 = int_to_ptr.vmem [resolvable:$true] %s149
          %155 = dma.hbm_to_vmem [thread:$0]  %s3, 2048, %s150, [#allocation10], 64, 64, 4
        $region16: #{tpu_custom_call.1} parent=11 // pred_fallthru
          _
      $region12: #{tpu_custom_call.1} parent=5 // pred_fallthru
        _
      %p156 = scmp.lt.s32.totalorder %s25, 2
      // Predicated region
      $region17: #{tpu_custom_call.1} parent=5 // pred_check
        %p157 = pneg %p156
      $region18: #{tpu_custom_call.1} parent=5 // pred_check_branch
        %159 = sbr.rel (%p157) target = $region20
      $region19: #{tpu_custom_call.1} parent=5 // pred_region
        // Predicated region
        $region21: #{tpu_custom_call.1} parent=19 // pred_check
          %p160 = pneg %p75
        $region22: #{tpu_custom_call.1} parent=19 // pred_check_branch
          %162 = sbr.rel (%p160) target = $region24
        $region23: #{tpu_custom_call.1} parent=19 // pred_region
          %s163 = sand.u32 %s65, 1
          %s164 = scalar_lea.sflag [#allocation7], %s163
          %s165 = sand.u32 %s65, 1
          %s166 = smul.addr %s165, 128
          %s167 = scalar_lea.vmem [#allocation6], %s166
          %s168 = sld [smem:[#allocation4 + %s32]]
          %s169 = sld [smem:[#allocation5 + %s32]]
          %s170 = ssub.s32 %s169, 1
          %p171 = scmp.lt.s32.totalorder %s33, %s170
          %s172 = scalar_select %p171, %s33, %s170
          %p173 = scmp.gt.s32.totalorder %s172, 0
          %s174 = scalar_select %p173, %s172, 0
          %s175 = sadd.s32 %s168, %s174
          %s176 = smul.u32 16, %s32
          %s177 = smul.u32 2, %s175
          %s179 = ssub.s32 2048, 2048
          %180 = vsyncadd %s164, %s179
          %s181 = smul.addr %s176, 2
          %s182 = sadd.s32 %s177, %s181
          %s183 = smul.addr %s182, 64
          %s184 = scalar_lea.hbm %s2, %s183
          %s185 = sshll.u32 %s167, 4
          %s186 = int_to_ptr.vmem [resolvable:$true] %s185
          %191 = dma.hbm_to_vmem [thread:$0]  %s184, 2048, %s186, %s164, 128, 128, 8
        $region24: #{tpu_custom_call.1} parent=19 // pred_fallthru
          _
      $region20: #{tpu_custom_call.1} parent=5 // pred_fallthru
        _
      %p192 = scmp.le.s32.totalorder 1, %s25
      %p193 = scmp.lt.s32.totalorder %s25, 3
      %p194 = pnand %p192, %p193
      %p195 = pneg %p194
      // Predicated region
      $region25: #{tpu_custom_call.1} parent=5 // pred_check
        _
      $region26: #{tpu_custom_call.1} parent=5 // pred_check_branch
        %197 = sbr.rel (%p194) target = $region28
      $region27: #{tpu_custom_call.1} parent=5 // pred_region
        %s198 = ssub.s32 %s25, 1
        %s199 = sand.u32 %s68, 1
        %s200 = scalar_lea.sflag [#allocation7], %s199
        %s201 = sand.u32 %s68, 1
        %s202 = smul.addr %s201, 128
        %s203 = scalar_lea.vmem [#allocation6], %s202
        // Predicated region
        $region29: #{tpu_custom_call.1} parent=27 // pred_check
          %p204 = pneg %p81
        $region30: #{tpu_custom_call.1} parent=27 // pred_check_branch
          %206 = sbr.rel (%p204) target = $region32
        $region31: #{tpu_custom_call.1} parent=27 // pred_region
          %207 = dma.done %s200, 2048
        $region32: #{tpu_custom_call.1} parent=27 // pred_fallthru
          _
        // Predicated region
        $region33: #{tpu_custom_call.1} parent=27 // pred_check
          %p208 = pneg %p102
        $region34: #{tpu_custom_call.1} parent=27 // pred_check_branch
          %210 = sbr.rel (%p208) target = $region36
        $region35: #{tpu_custom_call.1} parent=27 // pred_region
          %211 = dma.done [#allocation10], 2048
        $region36: #{tpu_custom_call.1} parent=27 // pred_fallthru
          _
        %s212 = sand.u32 %s68, 1
        %s213 = scalar_lea.sflag [#allocation7], %s212
        %s214 = sand.u32 %s68, 1
        %s215 = smul.addr %s214, 128
        %s216 = scalar_lea.vmem [#allocation6], %s215
        %p217 = pneg %p81
        %p218 = pneg %p78
        %p219 = pneg %p102
        %p220 = pneg %p99
        %p221 = pneg %p128
        %p222 = pneg %p125
        %s223 = sand.u32 %s115, 1
        %s224 = scalar_lea.sflag [#allocation8], %s223
        %s225 = sand.u32 %s115, 1
        %s226 = smul.addr %s225, 128
        %s227 = scalar_lea.vmem [#allocation11], %s226
        %s228 = sld [smem:[#allocation4 + %s34]]
        %s229 = sld [smem:[#allocation5 + %s34]]
        %s230 = ssub.s32 %s229, 1
        %p231 = scmp.lt.s32.totalorder %s35, %s230
        %s232 = scalar_select %p231, %s35, %s230
        %p233 = scmp.gt.s32.totalorder %s232, 0
        %s234 = scalar_select %p233, %s232, 0
        %s235 = sadd.s32 %s228, %s234
        %s236 = smul.u32 16, %s34
        %s237 = smul.u32 2, %s235
        %s238 = smul.u32 16, %s34
        %p240 = scmp.eq.s32.totalorder %s35, 0
        // Predicated region
        $region37: #{tpu_custom_call.1} parent=27 // pred_check
          %p241 = pneg %p240
        $region38: #{tpu_custom_call.1} parent=27 // pred_check_branch
          %243 = sbr.rel (%p241) target = $region40
        $region39: #{tpu_custom_call.1} parent=27 // pred_region
          %s244 = smul.u32 %s34, 128
          %s245 = sshra.s32 %s244, 3
          %s246 = sand.u32 %s244, 7
          %s247 = smul.addr %s245, 4
          %s248 = scalar_lea.vmem [#allocation9], %s247
          %v249 = vld [vmem:[%s248] sm:$0xf]
          %v250 = vld [vmem:[%s248 + $0x4] sm:$0xf]
          %v251 = vld [vmem:[%s248 + $0x8] sm:$0xf]
          %v252 = vld [vmem:[%s248 + $0xc] sm:$0xf]
          %v253 = vld [vmem:[%s248 + $0x10] sm:$0xf]
          %v254 = vld [vmem:[%s248 + $0x14] sm:$0xf]
          %v255 = vld [vmem:[%s248 + $0x18] sm:$0xf]
          %v256 = vld [vmem:[%s248 + $0x1c] sm:$0xf]
          %v257 = vld [vmem:[%s248 + $0x20] sm:$0xf]
          %v258 = vld [vmem:[%s248 + $0x24] sm:$0xf]
          %v259 = vld [vmem:[%s248 + $0x28] sm:$0xf]
          %v260 = vld [vmem:[%s248 + $0x2c] sm:$0xf]
          %v261 = vld [vmem:[%s248 + $0x30] sm:$0xf]
          %v262 = vld [vmem:[%s248 + $0x34] sm:$0xf]
          %v263 = vld [vmem:[%s248 + $0x38] sm:$0xf]
          %v264 = vld [vmem:[%s248 + $0x3c] sm:$0xf]
          %v265 = vunpack.c.l.bf16 %v249
          %v266 = vunpack.c.l.bf16 %v250
          %v267 = vunpack.c.l.bf16 %v251
          %v268 = vunpack.c.l.bf16 %v252
          %v269 = vunpack.c.l.bf16 %v253
          %v270 = vunpack.c.l.bf16 %v254
          %v271 = vunpack.c.l.bf16 %v255
          %v272 = vunpack.c.l.bf16 %v256
          %v273 = vunpack.c.l.bf16 %v257
          %v274 = vunpack.c.l.bf16 %v258
          %v275 = vunpack.c.l.bf16 %v259
          %v276 = vunpack.c.l.bf16 %v260
          %v277 = vunpack.c.l.bf16 %v261
          %v278 = vunpack.c.l.bf16 %v262
          %v279 = vunpack.c.l.bf16 %v263
          %v280 = vunpack.c.l.bf16 %v264
          %v281 = vmul.f32 %v265, 0.5
          %v282 = vmul.f32 %v266, 0.5
          %v283 = vmul.f32 %v267, 0.5
          %v284 = vmul.f32 %v268, 0.5
          %v285 = vmul.f32 %v269, 0.5
          %v286 = vmul.f32 %v270, 0.5
          %v287 = vmul.f32 %v271, 0.5
          %v288 = vmul.f32 %v272, 0.5
          %v289 = vmul.f32 %v273, 0.5
          %v290 = vmul.f32 %v274, 0.5
          %v291 = vmul.f32 %v275, 0.5
          %v292 = vmul.f32 %v276, 0.5
          %v293 = vmul.f32 %v277, 0.5
          %v294 = vmul.f32 %v278, 0.5
          %v295 = vmul.f32 %v279, 0.5
          %v296 = vmul.f32 %v280, 0.5
          %297 = vst [vmem:[#allocation2] sm:$0xff] %v281
          %298 = vst [vmem:[#allocation2 + $0x8] sm:$0xff] %v282
          %299 = vst [vmem:[#allocation2 + $0x10] sm:$0xff] %v283
          %300 = vst [vmem:[#allocation2 + $0x18] sm:$0xff] %v284
          %301 = vst [vmem:[#allocation2 + $0x20] sm:$0xff] %v285
          %302 = vst [vmem:[#allocation2 + $0x28] sm:$0xff] %v286
          %303 = vst [vmem:[#allocation2 + $0x30] sm:$0xff] %v287
          %304 = vst [vmem:[#allocation2 + $0x38] sm:$0xff] %v288
          %305 = vst [vmem:[#allocation2 + $0x40] sm:$0xff] %v289
          %306 = vst [vmem:[#allocation2 + $0x48] sm:$0xff] %v290
          %307 = vst [vmem:[#allocation2 + $0x50] sm:$0xff] %v291
          %308 = vst [vmem:[#allocation2 + $0x58] sm:$0xff] %v292
          %309 = vst [vmem:[#allocation2 + $0x60] sm:$0xff] %v293
          %310 = vst [vmem:[#allocation2 + $0x68] sm:$0xff] %v294
          %311 = vst [vmem:[#allocation2 + $0x70] sm:$0xff] %v295
          %312 = vst [vmem:[#allocation2 + $0x78] sm:$0xff] %v296
        $region40: #{tpu_custom_call.1} parent=27 // pred_fallthru
          _
        %s313 = sld [smem:[#allocation5 + %s34]]
        %p314 = scmp.lt.s32.totalorder %s35, %s313
        // Predicated region
        $region41: #{tpu_custom_call.1} parent=27 // pred_check
          %p315 = pneg %p314
        $region42: #{tpu_custom_call.1} parent=27 // pred_check_branch
          %317 = sbr.rel (%p315) target = $region44
        $region43: #{tpu_custom_call.1} parent=27 // pred_region
          %s318 = sld [smem:[#allocation4 + %s34]]
          %s319 = sadd.s32 %s318, %s35
          %s320 = smul.u32 %s319, 256
          %v321 = vld [vmem:[#allocation2] sm:$0xff]
          %v322 = vld [vmem:[#allocation2 + $0x8] sm:$0xff]
          %v323 = vld [vmem:[#allocation2 + $0x10] sm:$0xff]
          %v324 = vld [vmem:[#allocation2 + $0x18] sm:$0xff]
          %v325 = vld [vmem:[#allocation2 + $0x20] sm:$0xff]
          %v326 = vld [vmem:[#allocation2 + $0x28] sm:$0xff]
          %v327 = vld [vmem:[#allocation2 + $0x30] sm:$0xff]
          %v328 = vld [vmem:[#allocation2 + $0x38] sm:$0xff]
          %v329 = vld [vmem:[#allocation2 + $0x40] sm:$0xff]
          %v330 = vld [vmem:[#allocation2 + $0x48] sm:$0xff]
          %v331 = vld [vmem:[#allocation2 + $0x50] sm:$0xff]
          %v332 = vld [vmem:[#allocation2 + $0x58] sm:$0xff]
          %v333 = vld [vmem:[#allocation2 + $0x60] sm:$0xff]
          %v334 = vld [vmem:[#allocation2 + $0x68] sm:$0xff]
          %v335 = vld [vmem:[#allocation2 + $0x70] sm:$0xff]
          %v336 = vld [vmem:[#allocation2 + $0x78] sm:$0xff]
          %v337 = vld [vmem:[%s203] sm:$0xff]
          %v338 = vld [vmem:[%s203 + $0x8] sm:$0xff]
          %v339 = vld [vmem:[%s203 + $0x10] sm:$0xff]
          %v340 = vld [vmem:[%s203 + $0x18] sm:$0xff]
          %v341 = vld [vmem:[%s203 + $0x20] sm:$0xff]
          %v342 = vld [vmem:[%s203 + $0x28] sm:$0xff]
          %v343 = vld [vmem:[%s203 + $0x30] sm:$0xff]
          %v344 = vld [vmem:[%s203 + $0x38] sm:$0xff]
          %v345 = vld [vmem:[%s203 + $0x40] sm:$0xff]
          %v346 = vld [vmem:[%s203 + $0x48] sm:$0xff]
          %v347 = vld [vmem:[%s203 + $0x50] sm:$0xff]
          %v348 = vld [vmem:[%s203 + $0x58] sm:$0xff]
          %v349 = vld [vmem:[%s203 + $0x60] sm:$0xff]
          %v350 = vld [vmem:[%s203 + $0x68] sm:$0xff]
          %v351 = vld [vmem:[%s203 + $0x70] sm:$0xff]
          %v352 = vld [vmem:[%s203 + $0x78] sm:$0xff]
          %s353 = sshra.s32 %s320, 3
          %s354 = sand.u32 %s320, 7
          %s355 = smul.addr %s353, 4
          %s356 = scalar_lea.vmem [#allocation9], %s355
          %v357 = vld [vmem:[%s356] sm:$0xf]
          %v358 = vld [vmem:[%s356 + $0x4] sm:$0xf]
          %v359 = vld [vmem:[%s356 + $0x8] sm:$0xf]
          %v360 = vld [vmem:[%s356 + $0xc] sm:$0xf]
          %v361 = vld [vmem:[%s356 + $0x10] sm:$0xf]
          %v362 = vld [vmem:[%s356 + $0x14] sm:$0xf]
          %v363 = vld [vmem:[%s356 + $0x18] sm:$0xf]
          %v364 = vld [vmem:[%s356 + $0x1c] sm:$0xf]
          %v365 = vld [vmem:[%s356 + $0x20] sm:$0xf]
          %v366 = vld [vmem:[%s356 + $0x24] sm:$0xf]
          %v367 = vld [vmem:[%s356 + $0x28] sm:$0xf]
          %v368 = vld [vmem:[%s356 + $0x2c] sm:$0xf]
          %v369 = vld [vmem:[%s356 + $0x30] sm:$0xf]
          %v370 = vld [vmem:[%s356 + $0x34] sm:$0xf]
          %v371 = vld [vmem:[%s356 + $0x38] sm:$0xf]
          %v372 = vld [vmem:[%s356 + $0x3c] sm:$0xf]
          %v373 = vld [vmem:[%s356 + $0x40] sm:$0xf]
          %v374 = vld [vmem:[%s356 + $0x44] sm:$0xf]
          %v375 = vld [vmem:[%s356 + $0x48] sm:$0xf]
          %v376 = vld [vmem:[%s356 + $0x4c] sm:$0xf]
          %v377 = vld [vmem:[%s356 + $0x50] sm:$0xf]
          %v378 = vld [vmem:[%s356 + $0x54] sm:$0xf]
          %v379 = vld [vmem:[%s356 + $0x58] sm:$0xf]
          %v380 = vld [vmem:[%s356 + $0x5c] sm:$0xf]
          %v381 = vld [vmem:[%s356 + $0x60] sm:$0xf]
          %v382 = vld [vmem:[%s356 + $0x64] sm:$0xf]
          %v383 = vld [vmem:[%s356 + $0x68] sm:$0xf]
          %v384 = vld [vmem:[%s356 + $0x6c] sm:$0xf]
          %v385 = vld [vmem:[%s356 + $0x70] sm:$0xf]
          %v386 = vld [vmem:[%s356 + $0x74] sm:$0xf]
          %v387 = vld [vmem:[%s356 + $0x78] sm:$0xf]
          %v388 = vld [vmem:[%s356 + $0x7c] sm:$0xf]
          %v405 = vunpack.c.l.b16 %v337
          %v406 = vunpack.c.h.b16 %v337
          %v407 = vunpack.c.l.b16 %v338
          %v408 = vunpack.c.h.b16 %v338
          %v409 = vunpack.c.l.b16 %v339
          %v410 = vunpack.c.h.b16 %v339
          %v411 = vunpack.c.l.b16 %v340
          %v412 = vunpack.c.h.b16 %v340
          %v413 = vunpack.c.l.b16 %v341
          %v414 = vunpack.c.h.b16 %v341
          %v415 = vunpack.c.l.b16 %v342
          %v416 = vunpack.c.h.b16 %v342
          %v417 = vunpack.c.l.b16 %v343
          %v418 = vunpack.c.h.b16 %v343
          %v419 = vunpack.c.l.b16 %v344
          %v420 = vunpack.c.h.b16 %v344
          %v421 = vunpack.c.l.b16 %v345
          %v422 = vunpack.c.h.b16 %v345
          %v423 = vunpack.c.l.b16 %v346
          %v424 = vunpack.c.h.b16 %v346
          %v425 = vunpack.c.l.b16 %v347
          %v426 = vunpack.c.h.b16 %v347
          %v427 = vunpack.c.l.b16 %v348
          %v428 = vunpack.c.h.b16 %v348
          %v429 = vunpack.c.l.b16 %v349
          %v430 = vunpack.c.h.b16 %v349
          %v431 = vunpack.c.l.b16 %v350
          %v432 = vunpack.c.h.b16 %v350
          %v433 = vunpack.c.l.b16 %v351
          %v434 = vunpack.c.h.b16 %v351
          %v435 = vunpack.c.l.b16 %v352
          %v436 = vunpack.c.h.b16 %v352
          %v437 = vpack.c.b16 %v407, %v405
          %v438 = vpack.c.b16 %v408, %v406
          %v439 = vpack.c.b16 %v411, %v409
          %v440 = vpack.c.b16 %v412, %v410
          %v441 = vpack.c.b16 %v415, %v413
          %v442 = vpack.c.b16 %v416, %v414
          %v443 = vpack.c.b16 %v419, %v417
          %v444 = vpack.c.b16 %v420, %v418
          %v445 = vpack.c.b16 %v423, %v421
          %v446 = vpack.c.b16 %v424, %v422
          %v447 = vpack.c.b16 %v427, %v425
          %v448 = vpack.c.b16 %v428, %v426
          %v449 = vpack.c.b16 %v431, %v429
          %v450 = vpack.c.b16 %v432, %v430
          %v451 = vpack.c.b16 %v435, %v433
          %v452 = vpack.c.b16 %v436, %v434
          %v501 = vunpack.c.l.b16 %v357
          %v502 = vunpack.c.l.b16 %v358
          %v503 = vunpack.c.l.b16 %v359
          %v504 = vunpack.c.l.b16 %v360
          %v505 = vunpack.c.l.b16 %v361
          %v506 = vunpack.c.l.b16 %v362
          %v507 = vunpack.c.l.b16 %v363
          %v508 = vunpack.c.l.b16 %v364
          %v509 = vunpack.c.l.b16 %v365
          %v510 = vunpack.c.l.b16 %v366
          %v511 = vunpack.c.l.b16 %v367
          %v512 = vunpack.c.l.b16 %v368
          %v513 = vunpack.c.l.b16 %v369
          %v514 = vunpack.c.l.b16 %v370
          %v515 = vunpack.c.l.b16 %v371
          %v516 = vunpack.c.l.b16 %v372
          %v517 = vunpack.c.l.b16 %v373
          %v518 = vunpack.c.l.b16 %v374
          %v519 = vunpack.c.l.b16 %v375
          %v520 = vunpack.c.l.b16 %v376
          %v521 = vunpack.c.l.b16 %v377
          %v522 = vunpack.c.l.b16 %v378
          %v523 = vunpack.c.l.b16 %v379
          %v524 = vunpack.c.l.b16 %v380
          %v525 = vunpack.c.l.b16 %v381
          %v526 = vunpack.c.l.b16 %v382
          %v527 = vunpack.c.l.b16 %v383
          %v528 = vunpack.c.l.b16 %v384
          %v529 = vunpack.c.l.b16 %v385
          %v530 = vunpack.c.l.b16 %v386
          %v531 = vunpack.c.l.b16 %v387
          %v532 = vunpack.c.l.b16 %v388
          %v533 = vpack.c.b16 %v502, %v501
          %v534 = vpack.c.b16 %v504, %v503
          %v535 = vpack.c.b16 %v506, %v505
          %v536 = vpack.c.b16 %v508, %v507
          %v537 = vpack.c.b16 %v510, %v509
          %v538 = vpack.c.b16 %v512, %v511
          %v539 = vpack.c.b16 %v514, %v513
          %v540 = vpack.c.b16 %v516, %v515
          %v541 = vpack.c.b16 %v518, %v517
          %v542 = vpack.c.b16 %v520, %v519
          %v543 = vpack.c.b16 %v522, %v521
          %v544 = vpack.c.b16 %v524, %v523
          %v545 = vpack.c.b16 %v526, %v525
          %v546 = vpack.c.b16 %v528, %v527
          %v547 = vpack.c.b16 %v530, %v529
          %v548 = vpack.c.b16 %v532, %v531
          %565 = vmatprep.subr.bf16.mxu0 0
          %566 = vmatpush1.bf16.msra.mxu0 %v533
          %567 = vmatprep.subr.bf16.mxu0 0
          %568 = vmatpush1.bf16.msra.mxu0 %v534
          %569 = vmatprep.subr.bf16.mxu0 0
          %570 = vmatpush1.bf16.msra.mxu0 %v535
          %571 = vmatprep.subr.bf16.mxu0 0
          %572 = vmatpush1.bf16.msra.mxu0 %v536
          %573 = vmatprep.subr.bf16.mxu0 0
          %574 = vmatpush1.bf16.msra.mxu0 %v537
          %575 = vmatprep.subr.bf16.mxu0 0
          %576 = vmatpush1.bf16.msra.mxu0 %v538
          %577 = vmatprep.subr.bf16.mxu0 0
          %578 = vmatpush1.bf16.msra.mxu0 %v539
          %579 = vmatprep.subr.bf16.mxu0 0
          %580 = vmatpush1.bf16.msra.mxu0 %v540
          %581 = vmatprep.subr.bf16.mxu0 0
          %582 = vmatpush1.bf16.msra.mxu0 %v541
          %583 = vmatprep.subr.bf16.mxu0 0
          %584 = vmatpush1.bf16.msra.mxu0 %v542
          %585 = vmatprep.subr.bf16.mxu0 0
          %586 = vmatpush1.bf16.msra.mxu0 %v543
          %587 = vmatprep.subr.bf16.mxu0 0
          %588 = vmatpush1.bf16.msra.mxu0 %v544
          %589 = vmatprep.subr.bf16.mxu0 0
          %590 = vmatpush1.bf16.msra.mxu0 %v545
          %591 = vmatprep.subr.bf16.mxu0 0
          %592 = vmatpush1.bf16.msra.mxu0 %v546
          %593 = vmatprep.subr.bf16.mxu0 0
          %594 = vmatpush1.bf16.msra.mxu0 %v547
          %595 = vmatprep.subr.bf16.mxu0 0
          %596 = vmatpush1.bf16.msra.mxu0 %v548
          %597 = vmatprep.mubr.bf16.mxu0 %v438
          %598 = vmatmul.mubr.bf16.gmra.mrb[0].mxu0 %v437
          %v599 = vpop.f32.mrb[0].mxu0
          %v600 = vadd.f32 0.0, %v599
          %v601 = vpop.f32.mrb[0].mxu0
          %v602 = vpop.f32.mrb[0].mxu0
          %v603 = vadd.f32 0.0, %v602
          %v604 = vpop.f32.mrb[0].mxu0
          %605 = vmatprep.mubr.bf16.mxu0 %v440
          %606 = vmatmul.mubr.bf16.gmra.mrb[0].mxu0 %v439
          %v607 = vpop.f32.mrb[0].mxu0
          %v608 = vadd.f32 0.0, %v607
          %v609 = vpop.f32.mrb[0].mxu0
          %v610 = vpop.f32.mrb[0].mxu0
          %v611 = vadd.f32 0.0, %v610
          %v612 = vpop.f32.mrb[0].mxu0
          %613 = vmatprep.mubr.bf16.mxu0 %v442
          %614 = vmatmul.mubr.bf16.gmra.mrb[0].mxu0 %v441
          %v615 = vpop.f32.mrb[0].mxu0
          %v616 = vadd.f32 0.0, %v615
          %v617 = vpop.f32.mrb[0].mxu0
          %v618 = vpop.f32.mrb[0].mxu0
          %v619 = vadd.f32 0.0, %v618
          %v620 = vpop.f32.mrb[0].mxu0
          %621 = vmatprep.mubr.bf16.mxu0 %v444
          %622 = vmatmul.mubr.bf16.gmra.mrb[0].mxu0 %v443
          %v623 = vpop.f32.mrb[0].mxu0
          %v624 = vadd.f32 0.0, %v623
          %v625 = vpop.f32.mrb[0].mxu0
          %v626 = vpop.f32.mrb[0].mxu0
          %v627 = vadd.f32 0.0, %v626
          %v628 = vpop.f32.mrb[0].mxu0
          %629 = vmatprep.mubr.bf16.mxu0 %v446
          %630 = vmatmul.mubr.bf16.gmra.mrb[0].mxu0 %v445
          %v631 = vpop.f32.mrb[0].mxu0
          %v632 = vadd.f32 0.0, %v631
          %v633 = vpop.f32.mrb[0].mxu0
          %v634 = vpop.f32.mrb[0].mxu0
          %v635 = vadd.f32 0.0, %v634
          %v636 = vpop.f32.mrb[0].mxu0
          %637 = vmatprep.mubr.bf16.mxu0 %v448
          %638 = vmatmul.mubr.bf16.gmra.mrb[0].mxu0 %v447
          %v639 = vpop.f32.mrb[0].mxu0
          %v640 = vadd.f32 0.0, %v639
          %v641 = vpop.f32.mrb[0].mxu0
          %v642 = vpop.f32.mrb[0].mxu0
          %v643 = vadd.f32 0.0, %v642
          %v644 = vpop.f32.mrb[0].mxu0
          %645 = vmatprep.mubr.bf16.mxu0 %v450
          %646 = vmatmul.mubr.bf16.gmra.mrb[0].mxu0 %v449
          %v647 = vpop.f32.mrb[0].mxu0
          %v648 = vadd.f32 0.0, %v647
          %v649 = vpop.f32.mrb[0].mxu0
          %v650 = vpop.f32.mrb[0].mxu0
          %v651 = vadd.f32 0.0, %v650
          %v652 = vpop.f32.mrb[0].mxu0
          %653 = vmatprep.mubr.bf16.mxu0 %v452
          %654 = vmatmul.mubr.bf16.gmra.mrb[0].mxu0 %v451
          %v655 = vpop.f32.mrb[0].mxu0
          %v656 = vadd.f32 0.0, %v655
          %v657 = vpop.f32.mrb[0].mxu0
          %v658 = vpop.f32.mrb[0].mxu0
          %v659 = vadd.f32 0.0, %v658
          %v660 = vpop.f32.mrb[0].mxu0
          %661 = vdwg.mxu0
          %v662 = vadd.f32 %v321, %v600
          %v663 = vadd.f32 %v322, %v603
          %v664 = vadd.f32 %v323, %v608
          %v665 = vadd.f32 %v324, %v611
          %v666 = vadd.f32 %v325, %v616
          %v667 = vadd.f32 %v326, %v619
          %v668 = vadd.f32 %v327, %v624
          %v669 = vadd.f32 %v328, %v627
          %v670 = vadd.f32 %v329, %v632
          %v671 = vadd.f32 %v330, %v635
          %v672 = vadd.f32 %v331, %v640
          %v673 = vadd.f32 %v332, %v643
          %v674 = vadd.f32 %v333, %v648
          %v675 = vadd.f32 %v334, %v651
          %v676 = vadd.f32 %v335, %v656
          %v677 = vadd.f32 %v336, %v659
          %678 = vst [vmem:[#allocation2] sm:$0xff] %v662
          %679 = vst [vmem:[#allocation2 + $0x8] sm:$0xff] %v663
          %680 = vst [vmem:[#allocation2 + $0x10] sm:$0xff] %v664
          %681 = vst [vmem:[#allocation2 + $0x18] sm:$0xff] %v665
          %682 = vst [vmem:[#allocation2 + $0x20] sm:$0xff] %v666
          %683 = vst [vmem:[#allocation2 + $0x28] sm:$0xff] %v667
          %684 = vst [vmem:[#allocation2 + $0x30] sm:$0xff] %v668
          %685 = vst [vmem:[#allocation2 + $0x38] sm:$0xff] %v669
          %686 = vst [vmem:[#allocation2 + $0x40] sm:$0xff] %v670
          %687 = vst [vmem:[#allocation2 + $0x48] sm:$0xff] %v671
          %688 = vst [vmem:[#allocation2 + $0x50] sm:$0xff] %v672
          %689 = vst [vmem:[#allocation2 + $0x58] sm:$0xff] %v673
          %690 = vst [vmem:[#allocation2 + $0x60] sm:$0xff] %v674
          %691 = vst [vmem:[#allocation2 + $0x68] sm:$0xff] %v675
          %692 = vst [vmem:[#allocation2 + $0x70] sm:$0xff] %v676
          %693 = vst [vmem:[#allocation2 + $0x78] sm:$0xff] %v677
        $region44: #{tpu_custom_call.1} parent=27 // pred_fallthru
          _
        // Predicated region
        $region45: #{tpu_custom_call.1} parent=27 // pred_check
          %p694 = pneg %p240
        $region46: #{tpu_custom_call.1} parent=27 // pred_check_branch
          %696 = sbr.rel (%p694) target = $region48
        $region47: #{tpu_custom_call.1} parent=27 // pred_region
          %v697 = vld [vmem:[#allocation2] sm:$0xff]
          %v698 = vld [vmem:[#allocation2 + $0x8] sm:$0xff]
          %v699 = vld [vmem:[#allocation2 + $0x10] sm:$0xff]
          %v700 = vld [vmem:[#allocation2 + $0x18] sm:$0xff]
          %v701 = vld [vmem:[#allocation2 + $0x20] sm:$0xff]
          %v702 = vld [vmem:[#allocation2 + $0x28] sm:$0xff]
          %v703 = vld [vmem:[#allocation2 + $0x30] sm:$0xff]
          %v704 = vld [vmem:[#allocation2 + $0x38] sm:$0xff]
          %v705 = vld [vmem:[#allocation2 + $0x40] sm:$0xff]
          %v706 = vld [vmem:[#allocation2 + $0x48] sm:$0xff]
          %v707 = vld [vmem:[#allocation2 + $0x50] sm:$0xff]
          %v708 = vld [vmem:[#allocation2 + $0x58] sm:$0xff]
          %v709 = vld [vmem:[#allocation2 + $0x60] sm:$0xff]
          %v710 = vld [vmem:[#allocation2 + $0x68] sm:$0xff]
          %v711 = vld [vmem:[#allocation2 + $0x70] sm:$0xff]
          %v712 = vld [vmem:[#allocation2 + $0x78] sm:$0xff]
          %713 = vst [vmem:[%s227] sm:$0xff] %v697
          %714 = vst [vmem:[%s227 + $0x8] sm:$0xff] %v698
          %715 = vst [vmem:[%s227 + $0x10] sm:$0xff] %v699
          %716 = vst [vmem:[%s227 + $0x18] sm:$0xff] %v700
          %717 = vst [vmem:[%s227 + $0x20] sm:$0xff] %v701
          %718 = vst [vmem:[%s227 + $0x28] sm:$0xff] %v702
          %719 = vst [vmem:[%s227 + $0x30] sm:$0xff] %v703
          %720 = vst [vmem:[%s227 + $0x38] sm:$0xff] %v704
          %721 = vst [vmem:[%s227 + $0x40] sm:$0xff] %v705
          %722 = vst [vmem:[%s227 + $0x48] sm:$0xff] %v706
          %723 = vst [vmem:[%s227 + $0x50] sm:$0xff] %v707
          %724 = vst [vmem:[%s227 + $0x58] sm:$0xff] %v708
          %725 = vst [vmem:[%s227 + $0x60] sm:$0xff] %v709
          %726 = vst [vmem:[%s227 + $0x68] sm:$0xff] %v710
          %727 = vst [vmem:[%s227 + $0x70] sm:$0xff] %v711
          %728 = vst [vmem:[%s227 + $0x78] sm:$0xff] %v712
        $region48: #{tpu_custom_call.1} parent=27 // pred_fallthru
          _
        %s729 = sand.u32 %s115, 1
        %s730 = scalar_lea.sflag [#allocation8], %s729
        %s731 = sand.u32 %s115, 1
        %s732 = smul.addr %s731, 128
        %s733 = scalar_lea.vmem [#allocation11], %s732
        // Predicated region
        $region49: #{tpu_custom_call.1} parent=27 // pred_check
          %p734 = pneg %p125
        $region50: #{tpu_custom_call.1} parent=27 // pred_check_branch
          %736 = sbr.rel (%p734) target = $region52
        $region51: #{tpu_custom_call.1} parent=27 // pred_region
          %s737 = smul.u32 16, %s34
          %s739 = ssub.s32 2048, 2048
          %740 = vsyncadd %s730, %s739
          %s741 = smul.addr %s737, 128
          %s742 = scalar_lea.hbm %s4, %s741
          %s743 = sshll.u32 %s733, 4
          %s744 = int_to_ptr.vmem [resolvable:$true] %s743
          %749 = dma.vmem_to_hbm [thread:$0]  %s744, 2048, %s742, %s730, 128, 128, 8
        $region52: #{tpu_custom_call.1} parent=27 // pred_fallthru
          _
      $region28: #{tpu_custom_call.1} parent=5 // pred_fallthru
        _
      %p750 = scmp.le.s32.totalorder 2, %s25
      // Predicated region
      $region53: #{tpu_custom_call.1} parent=5 // pred_check
        %p751 = pneg %p750
      $region54: #{tpu_custom_call.1} parent=5 // pred_check_branch
        %753 = sbr.rel (%p751) target = $region56
      $region55: #{tpu_custom_call.1} parent=5 // pred_region
        %s754 = ssub.s32 %s25, 2
        // Predicated region
        $region57: #{tpu_custom_call.1} parent=55 // pred_check
          %p755 = pneg %p131
        $region58: #{tpu_custom_call.1} parent=55 // pred_check_branch
          %757 = sbr.rel (%p755) target = $region60
        $region59: #{tpu_custom_call.1} parent=55 // pred_region
          %s758 = sand.u32 %s116, 1
          %s759 = scalar_lea.sflag [#allocation8], %s758
          %s760 = sand.u32 %s116, 1
          %s761 = smul.addr %s760, 128
          %s762 = scalar_lea.vmem [#allocation11], %s761
          %763 = dma.done %s759, 2048
        $region60: #{tpu_custom_call.1} parent=55 // pred_fallthru
          _
      $region56: #{tpu_custom_call.1} parent=5 // pred_fallthru
        _
    $region6: #{tpu_custom_call.1} parent=1 // loop_footer
      %s29 = sadd.s32 1, %s25
    $region7: #{tpu_custom_call.1} parent=1 // loop_footer_branch
      %24 = sbr.rel target = $region3
    $region8: #{tpu_custom_call.1} parent=1 // loop_exit
      _
    %764 = vsyncpa [#allocation7], 1
    %s765 = scalar_lea.sflag [#allocation7], 1
    %766 = vsyncpa %s765, 1
    %767 = vsyncpa [#allocation10], 1
    %768 = vsyncpa [#allocation8], 1
    %s769 = scalar_lea.sflag [#allocation8], 1
    %770 = vsyncpa %s769, 1

</llo_original>
